<compile_context>
chip_gen: v6e
topology: v6e:2x2x1
jax: 0.10.0
libtpu: 0.0.40
codegen_flags: <defaults>
</compile_context>

<pallas_src>
import math
from functools import partial

import jax
import jax.numpy as jnp
from jax import lax
from jax.experimental import pallas as pl
from jax.experimental.pallas import tpu as pltpu


def _round_up(v, m):
    return ((v + m - 1) // m) * m


def _pcbc_kernel(t_ref, xs_ref, xe_ref, lhs_ref, out_ref, *, nc, k, d):
    """One lane-tile of the ProbabilisticCBC forward pass.

    t_ref   : [1,    TQ]          evaluation times (lanes = time samples)
    xs_ref  : [NCp,  1 ]          segment start knots (pad rows > last knot)
    xe_ref  : [NCp,  1 ]          segment end knots
    lhs_ref : [ROWS, 2*K1*NCp]    packed (position | covariance) LHS, binomial
                                  coefficients pre-folded in (see wrapper)
    out_ref : [ROWS, TQ]          rows 0..d-1 positions^T, d..d+d*d-1 covar^T,
                                  row d+d*d = bucket index (as f32), rest = 0
    """
    k1 = k + 1
    t = t_ref[...]                                           # [1, TQ]
    xs = xs_ref[...]                                         # [NCp, 1]
    xe = xe_ref[...]                                         # [NCp, 1]
    ncp = xs.shape[0]
    tq = t.shape[1]
    rows = out_ref.shape[0]
    idx_row = d + d * d

    # ---- bucketize in int32: idx = clamp(#(t >= xstart) - 1, 0, nc-1) -------
    ge = (t >= xs).astype(jnp.int32)                         # [NCp, TQ]
    cnt = jnp.sum(ge, axis=0, keepdims=True)                 # [1, TQ]
    idx = jnp.clip(cnt - 1, 0, nc - 1)                       # [1, TQ] int32

    # ---- gather segment bounds via a small one-hot over sublanes ------------
    nc_iota = lax.broadcasted_iota(jnp.int32, (ncp, tq), 0)
    onehot = (nc_iota == idx).astype(jnp.float32)            # [NCp, TQ]
    tstart = jnp.sum(onehot * xs, axis=0, keepdims=True)     # [1, TQ]
    tend = jnp.sum(onehot * xe, axis=0, keepdims=True)       # [1, TQ]
    s = (t - tstart) / (tend - tstart)                       # [1, TQ]
    oms = 1.0 - s

    # ---- Bernstein power chains (binomial coeffs are folded into the LHS) ---
    s_pow = [jnp.ones_like(s)]
    o_pow = [jnp.ones_like(s)]
    for _ in range(k):
        s_pow.append(s_pow[-1] * s)
        o_pow.append(o_pow[-1] * oms)

    # ---- RHS: per-j blocks [basis_j * onehot ; basis_j^2 * onehot] ----------
    # (NCp is a multiple of 8, so the sublane concat is tile-aligned.)
    parts = []
    for j in range(k1):
        bj = s_pow[j] * o_pow[k - j]                         # [1, TQ]
        parts.append(bj * onehot)                            # position weights
        parts.append((bj * bj) * onehot)                     # covariance weights
    rhs = jnp.concatenate(parts, axis=0)                     # [2*K1*NCp, TQ]

    # ---- single MXU contraction -> packed positions + covariances -----------
    packed = jnp.dot(lhs_ref[...], rhs, preferred_element_type=jnp.float32)

    # ---- drop the bucket index (exact small ints) into its reserved row -----
    row_iota = lax.broadcasted_iota(jnp.int32, (rows, tq), 0)
    out_ref[...] = jnp.where(row_iota == idx_row, idx.astype(jnp.float32), packed)


def probabilistic_cbc_forward(t, x_knots, control_points, covar_curves, *, max_tq=4096):
    """t: [T]; x_knots: [NC+1]; control_points: [NC, K+1, d]; covar_curves: [NC, K+1, d, d]."""
    NC, K1, d = control_points.shape
    K = K1 - 1
    dd = d * d
    T = t.shape[0]

    rows = _round_up(d + dd + 1, 8)          # packed output rows (+1 for idx)
    ncp = _round_up(NC, 8)                   # pad segments to a full sublane tile
    cw = 2 * K1 * ncp                        # packed LHS / RHS contraction width

    # ---- lane tile: scale with T, >= 2 tiles when possible (v7x megacore) ---
    if T <= 128:
        TQ = 128
    else:
        TQ = min(_round_up(max_tq, 128), _round_up(pl.cdiv(T, 2), 128))
        TQ = max(TQ, 128)
    num_tiles = pl.cdiv(T, TQ)
    Tpad = num_tiles * TQ

    # ---- inputs: time samples on lanes ---------------------------------------
    t_f = t.astype(jnp.float32)
    if Tpad != T:
        pad_val = x_knots[0].astype(jnp.float32)   # harmless in-domain value
        t_f = jnp.concatenate([t_f, jnp.broadcast_to(pad_val, (Tpad - T,))])
    t2 = t_f.reshape(1, Tpad)

    big = x_knots[-1].astype(jnp.float32) + 1.0    # finite pad knot (never selected)
    xs = jnp.full((ncp, 1), big, jnp.float32).at[:NC, 0].set(x_knots[:-1].astype(jnp.float32))
    xe = jnp.full((ncp, 1), big + 1.0, jnp.float32).at[:NC, 0].set(x_knots[1:].astype(jnp.float32))

    # ---- packed block-structured LHS, binomial coefficients folded in -------
    P = control_points.astype(jnp.float32)                     # [NC, K1, d]
    S = covar_curves.astype(jnp.float32).reshape(NC, K1, dd)   # [NC, K1, d*d]
    L = jnp.zeros((rows, cw), jnp.float32)
    for j in range(K1):
        c = float(math.comb(K, j))
        L = L.at[0:d, 2 * j * ncp:2 * j * ncp + NC].set(c * P[:, j, :].T)
        L = L.at[d:d + dd, (2 * j + 1) * ncp:(2 * j + 1) * ncp + NC].set((c * c) * S[:, j, :].T)

    # ---- VMEM budget from actual buffer sizes (+ headroom for temporaries) --
    io_bytes = 2 * 4 * TQ * (1 + rows)            # double-buffered t / packed-out blocks
    const_bytes = 2 * 4 * (2 * ncp + rows * cw)   # knots + LHS
    scratch_bytes = 4 * TQ * (cw + 16 * rows)     # rhs + elementwise intermediates
    vmem_limit = int(min(100 << 20, max(16 << 20, io_bytes + const_bytes + scratch_bytes)))

    kernel = partial(_pcbc_kernel, nc=NC, k=K, d=d)
    packed = pl.pallas_call(
        kernel,
        out_shape=jax.ShapeDtypeStruct((rows, Tpad), jnp.float32),
        grid=(num_tiles,),
        in_specs=[
            pl.BlockSpec((1, TQ), lambda i: (0, i)),      # t tile (lanes)
            pl.BlockSpec((ncp, 1), lambda i: (0, 0)),     # xstart (grid-invariant)
            pl.BlockSpec((ncp, 1), lambda i: (0, 0)),     # xend   (grid-invariant)
            pl.BlockSpec((rows, cw), lambda i: (0, 0)),   # packed LHS (grid-invariant)
        ],
        out_specs=pl.BlockSpec((rows, TQ), lambda i: (0, i)),
        compiler_params=pltpu.CompilerParams(
            dimension_semantics=("parallel",),
            vmem_limit_bytes=vmem_limit,
        ),
    )(t2, xs, xe, L)

    # Consumer-facing layout matches the PyTorch module ([T, d] / [T, d, d]).
    # TODO(synk): a consumer accepting [d, T] / [d*d, T] could skip these transposes.
    positions = packed[:d, :T].T                          # [T, d]
    covar_points = packed[d:d + dd, :T].T.reshape(T, d, d)  # [T, d, d]
    idxbuckets = packed[d + dd, :T].astype(jnp.int32)     # [T]
    # TODO(synk): torch returns idxbuckets as int64; int32 is TPU-native here.
    return positions, covar_points, idxbuckets


def reference_forward(t, x_knots, control_points, covar_curves):
    """Pure-JAX reference mirroring the PyTorch module."""
    NC, K1, d = control_points.shape
    K = K1 - 1
    xstart, xend = x_knots[:-1], x_knots[1:]
    idx = jnp.clip(jnp.searchsorted(xstart, t, side="right") - 1, 0, NC - 1)
    tstart, tend = xstart[idx], xend[idx]
    s = (t - tstart) / (tend - tstart)
    M = jnp.stack(
        [math.comb(K, j) * s ** j * (1.0 - s) ** (K - j) for j in range(K1)], axis=-1
    )                                                        # [T, K+1]
    P_sel = control_points[idx]                              # [T, K+1, d]
    positions = jnp.sum(M[..., None] * P_sel, axis=-2)       # [T, d]
    S_sel = covar_curves[idx]                                # [T, K+1, d, d]
    covar = jnp.sum((M ** 2)[..., None, None] * S_sel, axis=-3)  # [T, d, d]
    return positions, covar, idx


if __name__ == "__main__":
    key = jax.random.PRNGKey(0)
    NC, K, d, T = 8, 3, 3, 1000        # 8 cubic segments in 3-D, 1000 query times
    K1 = K + 1
    k1, k2, k3, k4 = jax.random.split(key, 4)

    # ascending knot vector x (length NC+1)
    dx = 0.3 + jax.random.uniform(k1, (NC,), jnp.float32)
    x_knots = jnp.concatenate([jnp.zeros((1,), jnp.float32), jnp.cumsum(dx)])

    # C0-continuous control points: boundary control points shared across segments
    nodes = jax.random.normal(k2, (NC * K + 1, d), jnp.float32)
    seg_idx = jnp.arange(NC)[:, None] * K + jnp.arange(K1)[None, :]   # [NC, K+1]
    control_points = nodes[seg_idx]                                   # [NC, K+1, d]

    # PSD covariances, continuous across segment boundaries (module's __init__ check)
    A = jax.random.normal(k3, (NC * K + 1, d, d), jnp.float32)
    covs = jnp.einsum("nij,nkj->nik", A, A) + 0.1 * jnp.eye(d, dtype=jnp.float32)
    covar_curves = covs[seg_idx]                                      # [NC, K+1, d, d]

    # evaluation times strictly inside [x0, x_end)
    t = x_knots[0] + (x_knots[-1] - x_knots[0]) * 0.999 * jax.random.uniform(
        k4, (T,), jnp.float32
    )

    pos, cov, idx = probabilistic_cbc_forward(t, x_knots, control_points, covar_curves)
    jax.block_until_ready((pos, cov, idx))

    pos_r, cov_r, idx_r = reference_forward(t, x_knots, control_points, covar_curves)
    assert pos.shape == (T, d) and cov.shape == (T, d, d) and idx.shape == (T,)
    assert bool(jnp.all(idx == idx_r.astype(jnp.int32)))
    assert bool(jnp.allclose(pos, pos_r, rtol=2e-2, atol=2e-2))
    assert bool(jnp.allclose(cov, cov_r, rtol=2e-2, atol=2e-2))
    print("KERNEL_OK")
</pallas_src>

<mosaic_0001>
module attributes {stable_mosaic.version = 11 : i64} {
  func.func @_pcbc_kernel(%arg0: i32, %arg1: memref<1x512xf32, #tpu.memory_space<vmem>>, %arg2: memref<8x1xf32, #tpu.memory_space<vmem>>, %arg3: memref<8x1xf32, #tpu.memory_space<vmem>>, %arg4: memref<16x64xf32, #tpu.memory_space<vmem>>, %arg5: memref<16x512xf32, #tpu.memory_space<vmem>>) attributes {dimension_semantics = [#tpu.dimension_semantics<parallel>], iteration_bounds = array<i64: 2>, scalar_prefetch = 0 : i64, scratch_operands = 0 : i64, tpu.core_type = #tpu.core_type<tc>, window_params = [{transform_indices = @transform_0, window_bounds = array<i64: 1, 512>}, {pipeline_mode = #tpu.pipeline_mode<synchronous>, transform_indices = @transform_1, window_bounds = array<i64: 8, 1>}, {pipeline_mode = #tpu.pipeline_mode<synchronous>, transform_indices = @transform_2, window_bounds = array<i64: 8, 1>}, {pipeline_mode = #tpu.pipeline_mode<synchronous>, transform_indices = @transform_3, window_bounds = array<i64: 16, 64>}, {transform_indices = @transform_4, window_bounds = array<i64: 16, 512>}]} {
    %c0 = arith.constant 0 : index
    %c0_0 = arith.constant 0 : index
    %0 = vector.load %arg1[%c0, %c0_0] : memref<1x512xf32, #tpu.memory_space<vmem>>, vector<1x512xf32>
    %c0_1 = arith.constant 0 : index
    %c0_2 = arith.constant 0 : index
    %1 = vector.load %arg2[%c0_1, %c0_2] : memref<8x1xf32, #tpu.memory_space<vmem>>, vector<8x1xf32>
    %c0_3 = arith.constant 0 : index
    %c0_4 = arith.constant 0 : index
    %2 = vector.load %arg3[%c0_3, %c0_4] : memref<8x1xf32, #tpu.memory_space<vmem>>, vector<8x1xf32>
    %3 = vector.broadcast %0 : vector<1x512xf32> to vector<8x512xf32>
    %4 = vector.broadcast %1 : vector<8x1xf32> to vector<8x512xf32>
    %5 = arith.cmpf oge, %3, %4 : vector<8x512xf32>
    %6 = arith.extui %5 : vector<8x512xi1> to vector<8x512xi32>
    %cst = arith.constant dense<0> : vector<512xi32>
    %7 = vector.multi_reduction <add>, %6, %cst [0] : vector<8x512xi32> to vector<512xi32>
    %8 = vector.shape_cast %7 : vector<512xi32> to vector<1x512xi32>
    %c1_i32 = arith.constant 1 : i32
    %9 = vector.broadcast %c1_i32 : i32 to vector<1x512xi32>
    %10 = arith.subi %8, %9 : vector<1x512xi32>
    %c0_i32 = arith.constant 0 : i32
    %c7_i32 = arith.constant 7 : i32
    %11 = vector.broadcast %c0_i32 : i32 to vector<1x512xi32>
    %12 = arith.maxsi %11, %10 : vector<1x512xi32>
    %13 = vector.broadcast %c7_i32 : i32 to vector<1x512xi32>
    %14 = arith.minsi %13, %12 : vector<1x512xi32>
    %15 = tpu.iota {dimensions = array<i32: 0>} : vector<8x512xi32>
    %16 = vector.broadcast %14 : vector<1x512xi32> to vector<8x512xi32>
    %17 = arith.cmpi eq, %15, %16 : vector<8x512xi32>
    %18 = arith.extui %17 : vector<8x512xi1> to vector<8x512xi32>
    %19 = arith.sitofp %18 : vector<8x512xi32> to vector<8x512xf32>
    %20 = vector.broadcast %1 : vector<8x1xf32> to vector<8x512xf32>
    %21 = arith.mulf %19, %20 : vector<8x512xf32>
    %cst_5 = arith.constant dense<0.000000e+00> : vector<512xf32>
    %22 = vector.multi_reduction <add>, %21, %cst_5 [0] : vector<8x512xf32> to vector<512xf32>
    %23 = vector.shape_cast %22 : vector<512xf32> to vector<1x512xf32>
    %24 = vector.broadcast %2 : vector<8x1xf32> to vector<8x512xf32>
    %25 = arith.mulf %19, %24 : vector<8x512xf32>
    %cst_6 = arith.constant dense<0.000000e+00> : vector<512xf32>
    %26 = vector.multi_reduction <add>, %25, %cst_6 [0] : vector<8x512xf32> to vector<512xf32>
    %27 = vector.shape_cast %26 : vector<512xf32> to vector<1x512xf32>
    %28 = arith.subf %0, %23 : vector<1x512xf32>
    %29 = arith.subf %27, %23 : vector<1x512xf32>
    %30 = arith.divf %28, %29 : vector<1x512xf32>
    %cst_7 = arith.constant 1.000000e+00 : f32
    %31 = vector.broadcast %cst_7 : f32 to vector<1x512xf32>
    %32 = arith.subf %31, %30 : vector<1x512xf32>
    %cst_8 = arith.constant 1.000000e+00 : f32
    %33 = vector.broadcast %cst_8 : f32 to vector<1x512xf32>
    %cst_9 = arith.constant 1.000000e+00 : f32
    %34 = vector.broadcast %cst_9 : f32 to vector<1x512xf32>
    %35 = arith.mulf %33, %30 : vector<1x512xf32>
    %36 = arith.mulf %34, %32 : vector<1x512xf32>
    %37 = arith.mulf %35, %30 : vector<1x512xf32>
    %38 = arith.mulf %36, %32 : vector<1x512xf32>
    %39 = arith.mulf %37, %30 : vector<1x512xf32>
    %40 = arith.mulf %38, %32 : vector<1x512xf32>
    %41 = arith.mulf %33, %40 : vector<1x512xf32>
    %42 = vector.broadcast %41 : vector<1x512xf32> to vector<8x512xf32>
    %43 = arith.mulf %42, %19 : vector<8x512xf32>
    %44 = arith.mulf %41, %41 : vector<1x512xf32>
    %45 = vector.broadcast %44 : vector<1x512xf32> to vector<8x512xf32>
    %46 = arith.mulf %45, %19 : vector<8x512xf32>
    %47 = arith.mulf %35, %38 : vector<1x512xf32>
    %48 = vector.broadcast %47 : vector<1x512xf32> to vector<8x512xf32>
    %49 = arith.mulf %48, %19 : vector<8x512xf32>
    %50 = arith.mulf %47, %47 : vector<1x512xf32>
    %51 = vector.broadcast %50 : vector<1x512xf32> to vector<8x512xf32>
    %52 = arith.mulf %51, %19 : vector<8x512xf32>
    %53 = arith.mulf %37, %36 : vector<1x512xf32>
    %54 = vector.broadcast %53 : vector<1x512xf32> to vector<8x512xf32>
    %55 = arith.mulf %54, %19 : vector<8x512xf32>
    %56 = arith.mulf %53, %53 : vector<1x512xf32>
    %57 = vector.broadcast %56 : vector<1x512xf32> to vector<8x512xf32>
    %58 = arith.mulf %57, %19 : vector<8x512xf32>
    %59 = arith.mulf %39, %34 : vector<1x512xf32>
    %60 = vector.broadcast %59 : vector<1x512xf32> to vector<8x512xf32>
    %61 = arith.mulf %60, %19 : vector<8x512xf32>
    %62 = arith.mulf %59, %59 : vector<1x512xf32>
    %63 = vector.broadcast %62 : vector<1x512xf32> to vector<8x512xf32>
    %64 = arith.mulf %63, %19 : vector<8x512xf32>
    %65 = tpu.concatenate %43, %46, %49, %52, %55, %58, %61, %64 in 0 : vector<8x512xf32>, vector<8x512xf32>, vector<8x512xf32>, vector<8x512xf32>, vector<8x512xf32>, vector<8x512xf32>, vector<8x512xf32>, vector<8x512xf32> -> vector<64x512xf32>
    %c0_10 = arith.constant 0 : index
    %c0_11 = arith.constant 0 : index
    %66 = vector.load %arg4[%c0_10, %c0_11] : memref<16x64xf32, #tpu.memory_space<vmem>>, vector<16x64xf32>
    %cst_12 = arith.constant dense<0.000000e+00> : vector<16x512xf32>
    %67 = tpu.matmul %66, %65, %cst_12 {dimension_numbers = #tpu.dot_dimension_numbers<[1], [0], [0], [1], [0, 0, 1, 1], [], []>} : vector<16x64xf32>, vector<64x512xf32>, vector<16x512xf32> -> vector<16x512xf32>
    %68 = tpu.iota {dimensions = array<i32: 0>} : vector<16x512xi32>
    %c12_i32 = arith.constant 12 : i32
    %69 = vector.broadcast %c12_i32 : i32 to vector<16x512xi32>
    %70 = arith.cmpi eq, %68, %69 : vector<16x512xi32>
    %71 = arith.sitofp %14 : vector<1x512xi32> to vector<1x512xf32>
    %72 = vector.shape_cast %71 : vector<1x512xf32> to vector<1x512xf32>
    %73 = vector.broadcast %72 : vector<1x512xf32> to vector<16x512xf32>
    %74 = arith.select %70, %73, %67 : vector<16x512xi1>, vector<16x512xf32>
    %c0_13 = arith.constant 0 : index
    %c0_14 = arith.constant 0 : index
    %75 = vector.load %arg5[%c0_13, %c0_14] : memref<16x512xf32, #tpu.memory_space<vmem>>, vector<16x512xf32>
    tpu.vector_store %arg5[%c0_13, %c0_14], %74 {strides = array<i32>} : memref<16x512xf32, #tpu.memory_space<vmem>>, vector<16x512xf32>,
    return
  }
  func.func @transform_0(%arg0: i32) -> (i32, i32) {
    %c0_i32 = arith.constant 0 : i32
    %c0_i32_0 = arith.constant 0 : i32
    return %c0_i32, %arg0 : i32, i32
  }
  func.func @transform_1(%arg0: i32) -> (i32, i32) {
    %c0_i32 = arith.constant 0 : i32
    %c0_i32_0 = arith.constant 0 : i32
    %c0_i32_1 = arith.constant 0 : i32
    return %c0_i32, %c0_i32_0 : i32, i32
  }
  func.func @transform_2(%arg0: i32) -> (i32, i32) {
    %c0_i32 = arith.constant 0 : i32
    %c0_i32_0 = arith.constant 0 : i32
    %c0_i32_1 = arith.constant 0 : i32
    return %c0_i32, %c0_i32_0 : i32, i32
  }
  func.func @transform_3(%arg0: i32) -> (i32, i32) {
    %c0_i32 = arith.constant 0 : i32
    %c0_i32_0 = arith.constant 0 : i32
    %c0_i32_1 = arith.constant 0 : i32
    return %c0_i32, %c0_i32_0 : i32, i32
  }
  func.func @transform_4(%arg0: i32) -> (i32, i32) {
    %c0_i32 = arith.constant 0 : i32
    %c0_i32_0 = arith.constant 0 : i32
    return %c0_i32, %arg0 : i32, i32
  }
}

</mosaic_0001>

<llo_original>
// kernel: tpu_custom_call.1
$region0: #{tpu_custom_call.1}
  #allocation0 [shape = 'u32[]', space=smem, size = 0x4, offset = 0x4, fixed_abs, tag = 'smem constant byte address 0x4 - core index']
  #allocation1 [shape = 'u32[144,128]{1,0:T(1,128)}', space=vmem, size = 0x12000, scoped, tag = 'internal scratch']
  %s0 = inlined_call_operand.hbm [shape: f32[1,1024], index: 0, kind: input, shape index: {}]
  %s1 = inlined_call_operand.vmem [shape: f32[8,1], index: 1, kind: input, shape index: {}]
  %s2 = inlined_call_operand.vmem [shape: f32[8,1], index: 2, kind: input, shape index: {}]
  %s3 = inlined_call_operand.vmem [shape: f32[16,64], index: 3, kind: input, shape index: {}]
  %s4 = inlined_call_operand.hbm [shape: f32[16,1024], index: 4, kind: output, shape index: {}]
  %s5 = sld [smem:[#allocation0]]
  $region53: #{tpu_custom_call.1} parent=0
    _
  %s7 = ssub.s32 1, %s5
  %s8 = scalar_select 0, %s7, %s5
  $region1: #{tpu_custom_call.1} parent=0
    #allocation2 [shape = 'u8[4096]{0}', space=vmem, size = 0x1000, scoped, tag = 'input window, operand 0']
    #allocation3 [shape = 's32[2]{0}', space=sflag, size = 0x8, scoped, tag = 'scoped memory for tpu_custom_call.1']
    #allocation4 [shape = 's32[2]{0}', space=sflag, size = 0x8, scoped, tag = 'scoped memory for tpu_custom_call.1']
    #allocation5 [shape = 'u8[65536]{0}', space=vmem, size = 0x10000, scoped, tag = 'output window, operand 0']
    %9 = vsyncpa [#allocation3], 0
    %s10 = scalar_lea.sflag [#allocation3], 1
    %11 = vsyncpa %s10, 0
    %12 = vsyncpa [#allocation4], 0
    %s13 = scalar_lea.sflag [#allocation4], 1
    %14 = vsyncpa %s13, 0
    loop: start=0, step=1, limit=4
    $region2: #{tpu_custom_call.1} parent=1 // loop_pre_header
      _
    $region3: #{tpu_custom_call.1} parent=1 // loop_header
      %s16 = sphi 0, %s20
      %p17 = scmp.ge.s32.totalorder %s16, 4
      %s26 = sphi 0, %s28
      %s29 = sphi 0, %s26
      %s30 = sphi 0, %s29
      %s46 = sphi 0, %s30
      %s50 = sphi 0, %s50
      %s52 = sphi 0, %s50
      %s53 = sphi 0, %s52
      %s67 = sphi 0, %s53
      %s71 = sphi 0, %s71
      %s73 = sphi 0, %s71
      %s74 = sphi 0, %s73
      %s88 = sphi 0, %s74
      %s92 = sphi 0, %s92
      %s94 = sphi 0, %s92
      %s95 = sphi 0, %s94
      %s109 = sphi 0, %s95
      %s115 = sphi 0, %s117
      %s118 = sphi 0, %s115
      %s119 = sphi 0, %s118
      %s135 = sphi 0, %s119
    $region4: #{tpu_custom_call.1} parent=1 // loop_header_branch
      %19 = sbr.rel (%p17) target = $region8
    $region5: #{tpu_custom_call.1} parent=1 // loop_body
      %s21 = ssub.s32 %s16, 1
      %s22 = ssub.s32 %s16, 2
      %s23 = sadd.s32 %s16, 1
      %s24 = ssub.s32 %s16, %s23
      %p25 = scmp.eq.s32.totalorder %s24, 0
      %s27 = sadd.s32 %s26, 1
      %s28 = scalar_select %p25, %s26, %s27
      %p31 = pneg %p25
      %p32 = scmp.eq.s32.totalorder %s16, 1
      %p33 = por %p31, %p32
      %p34 = scmp.ne.s32.totalorder %s26, %s29
      %p35 = scmp.eq.s32.totalorder %s16, 0
      %p36 = por %p34, %p35
      %p37 = scmp.ne.s32.totalorder %s26, %s29
      %p38 = scmp.eq.s32.totalorder %s21, 1
      %p39 = por %p37, %p38
      %p40 = scmp.ne.s32.totalorder %s29, %s30
      %p41 = scmp.eq.s32.totalorder %s21, 0
      %p42 = por %p40, %p41
      %p43 = scmp.ne.s32.totalorder %s29, %s30
      %p44 = scmp.eq.s32.totalorder %s22, 1
      %p45 = por %p43, %p44
      %p47 = scmp.ne.s32.totalorder %s30, %s46
      %p48 = scmp.eq.s32.totalorder %s22, 0
      %p49 = por %p47, %p48
      %s51 = sadd.s32 %s50, 1
      %p54 = scmp.eq.s32.totalorder %s16, 1
      %p55 = scmp.ne.s32.totalorder %s50, %s52
      %p56 = scmp.eq.s32.totalorder %s16, 0
      %p57 = por %p55, %p56
      %p58 = scmp.ne.s32.totalorder %s50, %s52
      %p59 = scmp.eq.s32.totalorder %s21, 1
      %p60 = por %p58, %p59
      %p61 = scmp.ne.s32.totalorder %s52, %s53
      %p62 = scmp.eq.s32.totalorder %s21, 0
      %p63 = por %p61, %p62
      %p64 = scmp.ne.s32.totalorder %s52, %s53
      %p65 = scmp.eq.s32.totalorder %s22, 1
      %p66 = por %p64, %p65
      %p68 = scmp.ne.s32.totalorder %s53, %s67
      %p69 = scmp.eq.s32.totalorder %s22, 0
      %p70 = por %p68, %p69
      %s72 = sadd.s32 %s71, 1
      %p75 = scmp.eq.s32.totalorder %s16, 1
      %p76 = scmp.ne.s32.totalorder %s71, %s73
      %p77 = scmp.eq.s32.totalorder %s16, 0
      %p78 = por %p76, %p77
      %p79 = scmp.ne.s32.totalorder %s71, %s73
      %p80 = scmp.eq.s32.totalorder %s21, 1
      %p81 = por %p79, %p80
      %p82 = scmp.ne.s32.totalorder %s73, %s74
      %p83 = scmp.eq.s32.totalorder %s21, 0
      %p84 = por %p82, %p83
      %p85 = scmp.ne.s32.totalorder %s73, %s74
      %p86 = scmp.eq.s32.totalorder %s22, 1
      %p87 = por %p85, %p86
      %p89 = scmp.ne.s32.totalorder %s74, %s88
      %p90 = scmp.eq.s32.totalorder %s22, 0
      %p91 = por %p89, %p90
      %s93 = sadd.s32 %s92, 1
      %p96 = scmp.eq.s32.totalorder %s16, 1
      %p97 = scmp.ne.s32.totalorder %s92, %s94
      %p98 = scmp.eq.s32.totalorder %s16, 0
      %p99 = por %p97, %p98
      %p100 = scmp.ne.s32.totalorder %s92, %s94
      %p101 = scmp.eq.s32.totalorder %s21, 1
      %p102 = por %p100, %p101
      %p103 = scmp.ne.s32.totalorder %s94, %s95
      %p104 = scmp.eq.s32.totalorder %s21, 0
      %p105 = por %p103, %p104
      %p106 = scmp.ne.s32.totalorder %s94, %s95
      %p107 = scmp.eq.s32.totalorder %s22, 1
      %p108 = por %p106, %p107
      %p110 = scmp.ne.s32.totalorder %s95, %s109
      %p111 = scmp.eq.s32.totalorder %s22, 0
      %p112 = por %p110, %p111
      %s113 = ssub.s32 %s16, %s23
      %p114 = scmp.eq.s32.totalorder %s113, 0
      %s116 = sadd.s32 %s115, 1
      %s117 = scalar_select %p114, %s115, %s116
      %p120 = pneg %p114
      %p121 = scmp.eq.s32.totalorder %s16, 1
      %p122 = por %p120, %p121
      %p123 = scmp.ne.s32.totalorder %s115, %s118
      %p124 = scmp.eq.s32.totalorder %s16, 0
      %p125 = por %p123, %p124
      %p126 = scmp.ne.s32.totalorder %s115, %s118
      %p127 = scmp.eq.s32.totalorder %s21, 1
      %p128 = por %p126, %p127
      %p129 = scmp.ne.s32.totalorder %s118, %s119
      %p130 = scmp.eq.s32.totalorder %s21, 0
      %p131 = por %p129, %p130
      %p132 = scmp.ne.s32.totalorder %s118, %s119
      %p133 = scmp.eq.s32.totalorder %s22, 1
      %p134 = por %p132, %p133
      %p136 = scmp.ne.s32.totalorder %s119, %s135
      %p137 = scmp.eq.s32.totalorder %s22, 0
      %p138 = por %p136, %p137
      %p139 = scmp.le.s32.totalorder 1, %s16
      %p140 = scmp.lt.s32.totalorder %s16, 3
      %p141 = pnand %p139, %p140
      %p142 = pneg %p141
      // Predicated region
      $region9: #{tpu_custom_call.1} parent=5 // pred_check
        _
      $region10: #{tpu_custom_call.1} parent=5 // pred_check_branch
        %144 = sbr.rel (%p141) target = $region12
      $region11: #{tpu_custom_call.1} parent=5 // pred_region
        %s145 = ssub.s32 %s16, 1
        // Predicated region
        $region13: #{tpu_custom_call.1} parent=11 // pred_check
          %p146 = pneg %p63
        $region14: #{tpu_custom_call.1} parent=11 // pred_check_branch
          %148 = sbr.rel (%p146) target = $region16
        $region15: #{tpu_custom_call.1} parent=11 // pred_region
          _
        $region16: #{tpu_custom_call.1} parent=11 // pred_fallthru
          _
        // Predicated region
        $region17: #{tpu_custom_call.1} parent=11 // pred_check
          %p149 = pneg %p84
        $region18: #{tpu_custom_call.1} parent=11 // pred_check_branch
          %151 = sbr.rel (%p149) target = $region20
        $region19: #{tpu_custom_call.1} parent=11 // pred_region
          _
        $region20: #{tpu_custom_call.1} parent=11 // pred_fallthru
          _
        // Predicated region
        $region21: #{tpu_custom_call.1} parent=11 // pred_check
          %p152 = pneg %p105
        $region22: #{tpu_custom_call.1} parent=11 // pred_check_branch
          %154 = sbr.rel (%p152) target = $region24
        $region23: #{tpu_custom_call.1} parent=11 // pred_region
          _
        $region24: #{tpu_custom_call.1} parent=11 // pred_fallthru
          _
      $region12: #{tpu_custom_call.1} parent=5 // pred_fallthru
        _
      %p155 = scmp.lt.s32.totalorder %s16, 2
      // Predicated region
      $region25: #{tpu_custom_call.1} parent=5 // pred_check
        %p156 = pneg %p155
      $region26: #{tpu_custom_call.1} parent=5 // pred_check_branch
        %158 = sbr.rel (%p156) target = $region28
      $region27: #{tpu_custom_call.1} parent=5 // pred_region
        // Predicated region
        $region29: #{tpu_custom_call.1} parent=27 // pred_check
          %p159 = pneg %p36
        $region30: #{tpu_custom_call.1} parent=27 // pred_check_branch
          %161 = sbr.rel (%p159) target = $region32
        $region31: #{tpu_custom_call.1} parent=27 // pred_region
          %s162 = sand.u32 %s26, 1
          %s163 = scalar_lea.sflag [#allocation3], %s162
          %s164 = sand.u32 %s26, 1
          %s165 = smul.addr %s164, 4
          %s166 = scalar_lea.vmem [#allocation2], %s165
          %s167 = smul.u32 4, %s16
          %s169 = ssub.s32 64, 64
          %170 = vsyncadd %s163, %s169
          %s171 = smul.addr %s167, 16
          %s172 = scalar_lea.hbm %s0, %s171
          %s174 = sshll.u32 %s166, 4
          %s175 = int_to_ptr.vmem [resolvable:$true] %s174
          %177 = dma.hbm_to_vmem [thread:$0]  %s172, 64, %s175, %s163
        $region32: #{tpu_custom_call.1} parent=27 // pred_fallthru
          _
      $region28: #{tpu_custom_call.1} parent=5 // pred_fallthru
        _
      %p178 = scmp.le.s32.totalorder 1, %s16
      %p179 = scmp.lt.s32.totalorder %s16, 3
      %p180 = pnand %p178, %p179
      %p181 = pneg %p180
      // Predicated region
      $region33: #{tpu_custom_call.1} parent=5 // pred_check
        _
      $region34: #{tpu_custom_call.1} parent=5 // pred_check_branch
        %183 = sbr.rel (%p180) target = $region36
      $region35: #{tpu_custom_call.1} parent=5 // pred_region
        %s184 = ssub.s32 %s16, 1
        %s185 = sand.u32 %s29, 1
        %s186 = scalar_lea.sflag [#allocation3], %s185
        %s187 = sand.u32 %s29, 1
        %s188 = smul.addr %s187, 4
        %s189 = scalar_lea.vmem [#allocation2], %s188
        // Predicated region
        $region37: #{tpu_custom_call.1} parent=35 // pred_check
          %p190 = pneg %p42
        $region38: #{tpu_custom_call.1} parent=35 // pred_check_branch
          %192 = sbr.rel (%p190) target = $region40
        $region39: #{tpu_custom_call.1} parent=35 // pred_region
          %193 = dma.done %s186, 64
        $region40: #{tpu_custom_call.1} parent=35 // pred_fallthru
          _
        %s194 = sand.u32 %s29, 1
        %s195 = scalar_lea.sflag [#allocation3], %s194
        %s196 = sand.u32 %s29, 1
        %s197 = smul.addr %s196, 4
        %s198 = scalar_lea.vmem [#allocation2], %s197
        %p199 = pneg %p42
        %p200 = pneg %p39
        %p201 = pneg %p63
        %p202 = pneg %p60
        %p203 = pneg %p84
        %p204 = pneg %p81
        %p205 = pneg %p105
        %p206 = pneg %p102
        %p207 = pneg %p131
        %p208 = pneg %p128
        %s209 = sand.u32 %s118, 1
        %s210 = scalar_lea.sflag [#allocation4], %s209
        %s211 = sand.u32 %s118, 1
        %s212 = smul.addr %s211, 64
        %s213 = scalar_lea.vmem [#allocation5], %s212
        %s214 = smul.u32 4, %s21
        %s215 = smul.u32 4, %s21
        %v216 = vld [vmem:[%s189] sm:$0xf]
        %v217 = vld [vmem:[%s1] sm:$0xff]
        %v218 = vld [vmem:[%s2] sm:$0xff]
        %v220 = vlaneseq
        %v221 = vshrl.u32 %v220, 7
        %v222 = vsub.s32 0, %v221
        %v223 = vrot.slane %v216, %v222
        %v224 = vlaneseq
        %v225 = vshrl.u32 %v224, 7
        %v226 = vsub.s32 1, %v225
        %v227 = vrot.slane %v216, %v226
        %v228 = vlaneseq
        %v229 = vshrl.u32 %v228, 7
        %v230 = vsub.s32 2, %v229
        %v231 = vrot.slane %v216, %v230
        %v232 = vlaneseq
        %v233 = vshrl.u32 %v232, 7
        %v234 = vsub.s32 3, %v233
        %v235 = vrot.slane %v216, %v234
        %241 = vset.pattern.permute.xlu0 0
        %242 = vperm.xlu0 %241, %v217
        %v243 = vpop.permute.xlu0 %242
        %vm245 = vcmp.ge.f32.partialorder %v223, %v243
        %vm246 = vcmp.ge.f32.partialorder %v227, %v243
        %vm247 = vcmp.ge.f32.partialorder %v231, %v243
        %vm248 = vcmp.ge.f32.partialorder %v235, %v243
        %v249 = vsel %vm245, 1, 0
        %v250 = vsel %vm246, 1, 0
        %v251 = vsel %vm247, 1, 0
        %v252 = vsel %vm248, 1, 0
        %v253 = vrot.slane %v249, 4
        %v254 = vadd.s32 %v249, %v253
        %v255 = vrot.slane %v254, 2
        %v256 = vadd.s32 %v254, %v255
        %v257 = vrot.slane %v256, 1
        %v258 = vadd.s32 %v256, %v257
        %v259 = vrot.slane %v250, 4
        %v260 = vadd.s32 %v250, %v259
        %v261 = vrot.slane %v260, 2
        %v262 = vadd.s32 %v260, %v261
        %v263 = vrot.slane %v262, 1
        %v264 = vadd.s32 %v262, %v263
        %v265 = vrot.slane %v251, 4
        %v266 = vadd.s32 %v251, %v265
        %v267 = vrot.slane %v266, 2
        %v268 = vadd.s32 %v266, %v267
        %v269 = vrot.slane %v268, 1
        %v270 = vadd.s32 %v268, %v269
        %v271 = vrot.slane %v252, 4
        %v272 = vadd.s32 %v252, %v271
        %v273 = vrot.slane %v272, 2
        %v274 = vadd.s32 %v272, %v273
        %v275 = vrot.slane %v274, 1
        %v276 = vadd.s32 %v274, %v275
        %v277 = vsub.s32 %v258, 1
        %v278 = vsub.s32 %v264, 1
        %v279 = vsub.s32 %v270, 1
        %v280 = vsub.s32 %v276, 1
        %vm281 = vcmp.gt.s32.totalorder %v277, 0
        %v282 = vsel %vm281, %v277, 0
        %vm283 = vcmp.gt.s32.totalorder %v278, 0
        %v284 = vsel %vm283, %v278, 0
        %vm285 = vcmp.gt.s32.totalorder %v279, 0
        %v286 = vsel %vm285, %v279, 0
        %vm287 = vcmp.gt.s32.totalorder %v280, 0
        %v288 = vsel %vm287, %v280, 0
        %vm289 = vcmp.lt.s32.totalorder %v282, 7
        %v290 = vsel %vm289, %v282, 7
        %vm291 = vcmp.lt.s32.totalorder %v284, 7
        %v292 = vsel %vm291, %v284, 7
        %vm293 = vcmp.lt.s32.totalorder %v286, 7
        %v294 = vsel %vm293, %v286, 7
        %vm295 = vcmp.lt.s32.totalorder %v288, 7
        %v296 = vsel %vm295, %v288, 7
        %v297 = vlaneseq
        %v298 = vshrl.u32 %v297, 7
        %vm299 = vcmp.eq.s32.totalorder %v298, %v290
        %vm300 = vcmp.eq.s32.totalorder %v298, %v292
        %vm301 = vcmp.eq.s32.totalorder %v298, %v294
        %vm302 = vcmp.eq.s32.totalorder %v298, %v296
        %v303 = vsel %vm299, 1, 0
        %v304 = vsel %vm300, 1, 0
        %v305 = vsel %vm301, 1, 0
        %v306 = vsel %vm302, 1, 0
        %v307 = vcvt.s32.f32 %v303
        %v308 = vcvt.s32.f32 %v304
        %v309 = vcvt.s32.f32 %v305
        %v310 = vcvt.s32.f32 %v306
        %v311 = vmul.f32 %v307, %v243
        %v312 = vmul.f32 %v308, %v243
        %v313 = vmul.f32 %v309, %v243
        %v314 = vmul.f32 %v310, %v243
        %v315 = vrot.slane %v311, 4
        %v316 = vadd.f32 %v311, %v315
        %v317 = vrot.slane %v316, 2
        %v318 = vadd.f32 %v316, %v317
        %v319 = vrot.slane %v318, 1
        %v320 = vadd.f32 %v318, %v319
        %v321 = vrot.slane %v312, 4
        %v322 = vadd.f32 %v312, %v321
        %v323 = vrot.slane %v322, 2
        %v324 = vadd.f32 %v322, %v323
        %v325 = vrot.slane %v324, 1
        %v326 = vadd.f32 %v324, %v325
        %v327 = vrot.slane %v313, 4
        %v328 = vadd.f32 %v313, %v327
        %v329 = vrot.slane %v328, 2
        %v330 = vadd.f32 %v328, %v329
        %v331 = vrot.slane %v330, 1
        %v332 = vadd.f32 %v330, %v331
        %v333 = vrot.slane %v314, 4
        %v334 = vadd.f32 %v314, %v333
        %v335 = vrot.slane %v334, 2
        %v336 = vadd.f32 %v334, %v335
        %v337 = vrot.slane %v336, 1
        %v338 = vadd.f32 %v336, %v337
        %340 = vset.pattern.permute.xlu0 0
        %341 = vperm.xlu0 %340, %v218
        %v342 = vpop.permute.xlu0 %341
        %v344 = vmul.f32 %v307, %v342
        %v345 = vmul.f32 %v308, %v342
        %v346 = vmul.f32 %v309, %v342
        %v347 = vmul.f32 %v310, %v342
        %v348 = vrot.slane %v344, 4
        %v349 = vadd.f32 %v344, %v348
        %v350 = vrot.slane %v349, 2
        %v351 = vadd.f32 %v349, %v350
        %v352 = vrot.slane %v351, 1
        %v353 = vadd.f32 %v351, %v352
        %v354 = vrot.slane %v345, 4
        %v355 = vadd.f32 %v345, %v354
        %v356 = vrot.slane %v355, 2
        %v357 = vadd.f32 %v355, %v356
        %v358 = vrot.slane %v357, 1
        %v359 = vadd.f32 %v357, %v358
        %v360 = vrot.slane %v346, 4
        %v361 = vadd.f32 %v346, %v360
        %v362 = vrot.slane %v361, 2
        %v363 = vadd.f32 %v361, %v362
        %v364 = vrot.slane %v363, 1
        %v365 = vadd.f32 %v363, %v364
        %v366 = vrot.slane %v347, 4
        %v367 = vadd.f32 %v347, %v366
        %v368 = vrot.slane %v367, 2
        %v369 = vadd.f32 %v367, %v368
        %v370 = vrot.slane %v369, 1
        %v371 = vadd.f32 %v369, %v370
        %v376 = vcombine.low %v320, %v326
        %v377 = vcombine.low %v332, %v338
        %v379 = vunpack.c.l.s4 1966171168
        %v380 = vunpack.c.0.s8 %v379
        %v381 = vlaneseq
        %v382 = vshrl.u32 %v381, 7
        %v383 = vsub.s32 %v380, %v382
        %v384 = vrot.slane %v376, %v383
        %v386 = vunpack.c.l.s4 1966171168
        %v387 = vunpack.c.0.s8 %v386
        %v388 = vlaneseq
        %v389 = vshrl.u32 %v388, 7
        %v390 = vsub.s32 %v387, %v389
        %v391 = vrot.slane %v377, %v390
        %v392 = vcombine.low %v384, %v391
        %v394 = vunpack.c.l.s4 1966171168
        %v395 = vunpack.c.0.s8 %v394
        %v396 = vlaneseq
        %v397 = vshrl.u32 %v396, 7
        %v398 = vsub.s32 %v395, %v397
        %v399 = vrot.slane %v392, %v398
        %v401 = vsub.f32 %v216, %v399
        %v402 = vsub.f32 %v353, %v320
        %v403 = vsub.f32 %v359, %v326
        %v404 = vsub.f32 %v365, %v332
        %v405 = vsub.f32 %v371, %v338
        %v410 = vcombine.low %v402, %v403
        %v411 = vcombine.low %v404, %v405
        %v413 = vunpack.c.l.s4 1966171168
        %v414 = vunpack.c.0.s8 %v413
        %v415 = vlaneseq
        %v416 = vshrl.u32 %v415, 7
        %v417 = vsub.s32 %v414, %v416
        %v418 = vrot.slane %v410, %v417
        %v420 = vunpack.c.l.s4 1966171168
        %v421 = vunpack.c.0.s8 %v420
        %v422 = vlaneseq
        %v423 = vshrl.u32 %v422, 7
        %v424 = vsub.s32 %v421, %v423
        %v425 = vrot.slane %v411, %v424
        %v426 = vcombine.low %v418, %v425
        %v428 = vunpack.c.l.s4 1966171168
        %v429 = vunpack.c.0.s8 %v428
        %v430 = vlaneseq
        %v431 = vshrl.u32 %v430, 7
        %v432 = vsub.s32 %v429, %v431
        %v433 = vrot.slane %v426, %v432
        %v435 = vrcp.pop %v433
        %v436 = vmul.f32 %v401, %v435
        %v437 = vsub.f32 1.0, %v436
        %v438 = vmul.f32 %v436, %v436
        %v439 = vmul.f32 %v437, %v437
        %v440 = vmul.f32 %v438, %v436
        %v441 = vmul.f32 %v439, %v437
        %v443 = vlaneseq
        %v444 = vshrl.u32 %v443, 7
        %v445 = vsub.s32 0, %v444
        %v446 = vrot.slane %v441, %v445
        %v447 = vlaneseq
        %v448 = vshrl.u32 %v447, 7
        %v449 = vsub.s32 1, %v448
        %v450 = vrot.slane %v441, %v449
        %v451 = vlaneseq
        %v452 = vshrl.u32 %v451, 7
        %v453 = vsub.s32 2, %v452
        %v454 = vrot.slane %v441, %v453
        %v455 = vlaneseq
        %v456 = vshrl.u32 %v455, 7
        %v457 = vsub.s32 3, %v456
        %v458 = vrot.slane %v441, %v457
        %v463 = vmul.f32 %v446, %v307
        %v464 = vmul.f32 %v450, %v308
        %v465 = vmul.f32 %v454, %v309
        %v466 = vmul.f32 %v458, %v310
        %v467 = vmul.f32 %v441, %v441
        %v469 = vlaneseq
        %v470 = vshrl.u32 %v469, 7
        %v471 = vsub.s32 0, %v470
        %v472 = vrot.slane %v467, %v471
        %v473 = vlaneseq
        %v474 = vshrl.u32 %v473, 7
        %v475 = vsub.s32 1, %v474
        %v476 = vrot.slane %v467, %v475
        %v477 = vlaneseq
        %v478 = vshrl.u32 %v477, 7
        %v479 = vsub.s32 2, %v478
        %v480 = vrot.slane %v467, %v479
        %v481 = vlaneseq
        %v482 = vshrl.u32 %v481, 7
        %v483 = vsub.s32 3, %v482
        %v484 = vrot.slane %v467, %v483
        %v489 = vmul.f32 %v472, %v307
        %v490 = vmul.f32 %v476, %v308
        %v491 = vmul.f32 %v480, %v309
        %v492 = vmul.f32 %v484, %v310
        %v493 = vmul.f32 %v436, %v439
        %v495 = vlaneseq
        %v496 = vshrl.u32 %v495, 7
        %v497 = vsub.s32 0, %v496
        %v498 = vrot.slane %v493, %v497
        %v499 = vlaneseq
        %v500 = vshrl.u32 %v499, 7
        %v501 = vsub.s32 1, %v500
        %v502 = vrot.slane %v493, %v501
        %v503 = vlaneseq
        %v504 = vshrl.u32 %v503, 7
        %v505 = vsub.s32 2, %v504
        %v506 = vrot.slane %v493, %v505
        %v507 = vlaneseq
        %v508 = vshrl.u32 %v507, 7
        %v509 = vsub.s32 3, %v508
        %v510 = vrot.slane %v493, %v509
        %v515 = vmul.f32 %v498, %v307
        %v516 = vmul.f32 %v502, %v308
        %v517 = vmul.f32 %v506, %v309
        %v518 = vmul.f32 %v510, %v310
        %v519 = vmul.f32 %v493, %v493
        %v521 = vlaneseq
        %v522 = vshrl.u32 %v521, 7
        %v523 = vsub.s32 0, %v522
        %v524 = vrot.slane %v519, %v523
        %v525 = vlaneseq
        %v526 = vshrl.u32 %v525, 7
        %v527 = vsub.s32 1, %v526
        %v528 = vrot.slane %v519, %v527
        %v529 = vlaneseq
        %v530 = vshrl.u32 %v529, 7
        %v531 = vsub.s32 2, %v530
        %v532 = vrot.slane %v519, %v531
        %v533 = vlaneseq
        %v534 = vshrl.u32 %v533, 7
        %v535 = vsub.s32 3, %v534
        %v536 = vrot.slane %v519, %v535
        %v541 = vmul.f32 %v524, %v307
        %v542 = vmul.f32 %v528, %v308
        %v543 = vmul.f32 %v532, %v309
        %v544 = vmul.f32 %v536, %v310
        %v545 = vmul.f32 %v438, %v437
        %v547 = vlaneseq
        %v548 = vshrl.u32 %v547, 7
        %v549 = vsub.s32 0, %v548
        %v550 = vrot.slane %v545, %v549
        %v551 = vlaneseq
        %v552 = vshrl.u32 %v551, 7
        %v553 = vsub.s32 1, %v552
        %v554 = vrot.slane %v545, %v553
        %v555 = vlaneseq
        %v556 = vshrl.u32 %v555, 7
        %v557 = vsub.s32 2, %v556
        %v558 = vrot.slane %v545, %v557
        %v559 = vlaneseq
        %v560 = vshrl.u32 %v559, 7
        %v561 = vsub.s32 3, %v560
        %v562 = vrot.slane %v545, %v561
        %v567 = vmul.f32 %v550, %v307
        %v568 = vmul.f32 %v554, %v308
        %v569 = vmul.f32 %v558, %v309
        %v570 = vmul.f32 %v562, %v310
        %v571 = vmul.f32 %v545, %v545
        %v573 = vlaneseq
        %v574 = vshrl.u32 %v573, 7
        %v575 = vsub.s32 0, %v574
        %v576 = vrot.slane %v571, %v575
        %v577 = vlaneseq
        %v578 = vshrl.u32 %v577, 7
        %v579 = vsub.s32 1, %v578
        %v580 = vrot.slane %v571, %v579
        %v581 = vlaneseq
        %v582 = vshrl.u32 %v581, 7
        %v583 = vsub.s32 2, %v582
        %v584 = vrot.slane %v571, %v583
        %v585 = vlaneseq
        %v586 = vshrl.u32 %v585, 7
        %v587 = vsub.s32 3, %v586
        %v588 = vrot.slane %v571, %v587
        %v593 = vmul.f32 %v576, %v307
        %v594 = vmul.f32 %v580, %v308
        %v595 = vmul.f32 %v584, %v309
        %v596 = vmul.f32 %v588, %v310
        %v598 = vlaneseq
        %v599 = vshrl.u32 %v598, 7
        %v600 = vsub.s32 0, %v599
        %v601 = vrot.slane %v440, %v600
        %v602 = vlaneseq
        %v603 = vshrl.u32 %v602, 7
        %v604 = vsub.s32 1, %v603
        %v605 = vrot.slane %v440, %v604
        %v606 = vlaneseq
        %v607 = vshrl.u32 %v606, 7
        %v608 = vsub.s32 2, %v607
        %v609 = vrot.slane %v440, %v608
        %v610 = vlaneseq
        %v611 = vshrl.u32 %v610, 7
        %v612 = vsub.s32 3, %v611
        %v613 = vrot.slane %v440, %v612
        %v618 = vmul.f32 %v601, %v307
        %v619 = vmul.f32 %v605, %v308
        %v620 = vmul.f32 %v609, %v309
        %v621 = vmul.f32 %v613, %v310
        %v622 = vmul.f32 %v440, %v440
        %v624 = vlaneseq
        %v625 = vshrl.u32 %v624, 7
        %v626 = vsub.s32 0, %v625
        %v627 = vrot.slane %v622, %v626
        %v628 = vlaneseq
        %v629 = vshrl.u32 %v628, 7
        %v630 = vsub.s32 1, %v629
        %v631 = vrot.slane %v622, %v630
        %v632 = vlaneseq
        %v633 = vshrl.u32 %v632, 7
        %v634 = vsub.s32 2, %v633
        %v635 = vrot.slane %v622, %v634
        %v636 = vlaneseq
        %v637 = vshrl.u32 %v636, 7
        %v638 = vsub.s32 3, %v637
        %v639 = vrot.slane %v622, %v638
        %v644 = vmul.f32 %v627, %v307
        %v645 = vmul.f32 %v631, %v308
        %v646 = vmul.f32 %v635, %v309
        %v647 = vmul.f32 %v639, %v310
        %v648 = vld [vmem:[%s3] sm:$0xff]
        %v649 = vld [vmem:[%s3 + $0x8] sm:$0xff]
        %vm650 = vcmask 523264
        %v652 = vsel %vm650, %v648, 0
        %v655 = vsel %vm650, %v649, 0
        %657 = vmatprep.subr.mxu0 0.0
        %658 = vmatpush1.msra.mxu0 0.0
        %659 = vmatprep.subr.mxu0 0.0
        %660 = vmatpush1.msra.mxu0 0.0
        %661 = vmatprep.subr.mxu0 0.0
        %662 = vmatpush1.msra.mxu0 0.0
        %663 = vmatprep.subr.mxu0 0.0
        %664 = vmatpush1.msra.mxu0 0.0
        %665 = vmatprep.subr.mxu0 0.0
        %666 = vmatpush1.msra.mxu0 0.0
        %667 = vmatprep.subr.mxu0 0.0
        %668 = vmatpush1.msra.mxu0 0.0
        %669 = vmatprep.subr.mxu0 0.0
        %670 = vmatpush1.msra.mxu0 0.0
        %671 = vmatprep.subr.mxu0 0.0
        %672 = vmatpush1.msra.mxu0 0.0
        %673 = vmatprep.subr.mxu0 %v645
        %674 = vmatpush1.msra.mxu0 %v644
        %675 = vmatprep.subr.mxu0 %v619
        %676 = vmatpush1.msra.mxu0 %v618
        %677 = vmatprep.subr.mxu0 %v594
        %678 = vmatpush1.msra.mxu0 %v593
        %679 = vmatprep.subr.mxu0 %v568
        %680 = vmatpush1.msra.mxu0 %v567
        %681 = vmatprep.subr.mxu0 %v542
        %682 = vmatpush1.msra.mxu0 %v541
        %683 = vmatprep.subr.mxu0 %v516
        %684 = vmatpush1.msra.mxu0 %v515
        %685 = vmatprep.subr.mxu0 %v490
        %686 = vmatpush1.msra.mxu0 %v489
        %687 = vmatprep.subr.mxu0 %v464
        %688 = vmatpush1.msra.mxu0 %v463
        %689 = vmatprep.subr.mxu0 0.0
        %690 = vmatpush2.msra.mxu0 0.0
        %691 = vmatprep.subr.mxu0 0.0
        %692 = vmatpush2.msra.mxu0 0.0
        %693 = vmatprep.subr.mxu0 0.0
        %694 = vmatpush2.msra.mxu0 0.0
        %695 = vmatprep.subr.mxu0 0.0
        %696 = vmatpush2.msra.mxu0 0.0
        %697 = vmatprep.subr.mxu0 0.0
        %698 = vmatpush2.msra.mxu0 0.0
        %699 = vmatprep.subr.mxu0 0.0
        %700 = vmatpush2.msra.mxu0 0.0
        %701 = vmatprep.subr.mxu0 0.0
        %702 = vmatpush2.msra.mxu0 0.0
        %703 = vmatprep.subr.mxu0 0.0
        %704 = vmatpush2.msra.mxu0 0.0
        %705 = vmatprep.subr.mxu0 0.0
        %706 = vmatpush2.msra.mxu0 0.0
        %707 = vmatprep.subr.mxu0 0.0
        %708 = vmatpush2.msra.mxu0 0.0
        %709 = vmatprep.subr.mxu0 0.0
        %710 = vmatpush2.msra.mxu0 0.0
        %711 = vmatprep.subr.mxu0 0.0
        %712 = vmatpush2.msra.mxu0 0.0
        %713 = vmatprep.subr.mxu0 0.0
        %714 = vmatpush2.msra.mxu0 0.0
        %715 = vmatprep.subr.mxu0 0.0
        %716 = vmatpush2.msra.mxu0 0.0
        %717 = vmatprep.subr.mxu0 0.0
        %718 = vmatpush2.msra.mxu0 0.0
        %719 = vmatprep.subr.mxu0 0.0
        %720 = vmatpush2.msra.mxu0 0.0
        %721 = vmatprep.mubr.f32.mxu0 0.0
        %722 = vmatmul.mubr.f32.gmra.mxu0 %v652
        %v723 = vpop.f32.mrf.mxu0
        %v724 = vadd.f32 0.0, %v723
        %v725 = vpop.f32.mrf.mxu0
        %v726 = vadd.f32 0.0, %v725
        %727 = vmatprep.mubr.f32.mxu0 0.0
        %728 = vmatmul.mubr.f32.gmra.mxu0 %v655
        %v729 = vpop.f32.mrf.mxu0
        %v730 = vadd.f32 0.0, %v729
        %v731 = vpop.f32.mrf.mxu0
        %v732 = vadd.f32 0.0, %v731
        %733 = vdwg.mxu0
        %734 = vmatprep.subr.mxu0 0.0
        %735 = vmatpush1.msra.mxu0 0.0
        %736 = vmatprep.subr.mxu0 0.0
        %737 = vmatpush1.msra.mxu0 0.0
        %738 = vmatprep.subr.mxu0 0.0
        %739 = vmatpush1.msra.mxu0 0.0
        %740 = vmatprep.subr.mxu0 0.0
        %741 = vmatpush1.msra.mxu0 0.0
        %742 = vmatprep.subr.mxu0 0.0
        %743 = vmatpush1.msra.mxu0 0.0
        %744 = vmatprep.subr.mxu0 0.0
        %745 = vmatpush1.msra.mxu0 0.0
        %746 = vmatprep.subr.mxu0 0.0
        %747 = vmatpush1.msra.mxu0 0.0
        %748 = vmatprep.subr.mxu0 0.0
        %749 = vmatpush1.msra.mxu0 0.0
        %750 = vmatprep.subr.mxu0 %v647
        %751 = vmatpush1.msra.mxu0 %v646
        %752 = vmatprep.subr.mxu0 %v621
        %753 = vmatpush1.msra.mxu0 %v620
        %754 = vmatprep.subr.mxu0 %v596
        %755 = vmatpush1.msra.mxu0 %v595
        %756 = vmatprep.subr.mxu0 %v570
        %757 = vmatpush1.msra.mxu0 %v569
        %758 = vmatprep.subr.mxu0 %v544
        %759 = vmatpush1.msra.mxu0 %v543
        %760 = vmatprep.subr.mxu0 %v518
        %761 = vmatpush1.msra.mxu0 %v517
        %762 = vmatprep.subr.mxu0 %v492
        %763 = vmatpush1.msra.mxu0 %v491
        %764 = vmatprep.subr.mxu0 %v466
        %765 = vmatpush1.msra.mxu0 %v465
        %766 = vmatprep.subr.mxu0 0.0
        %767 = vmatpush2.msra.mxu0 0.0
        %768 = vmatprep.subr.mxu0 0.0
        %769 = vmatpush2.msra.mxu0 0.0
        %770 = vmatprep.subr.mxu0 0.0
        %771 = vmatpush2.msra.mxu0 0.0
        %772 = vmatprep.subr.mxu0 0.0
        %773 = vmatpush2.msra.mxu0 0.0
        %774 = vmatprep.subr.mxu0 0.0
        %775 = vmatpush2.msra.mxu0 0.0
        %776 = vmatprep.subr.mxu0 0.0
        %777 = vmatpush2.msra.mxu0 0.0
        %778 = vmatprep.subr.mxu0 0.0
        %779 = vmatpush2.msra.mxu0 0.0
        %780 = vmatprep.subr.mxu0 0.0
        %781 = vmatpush2.msra.mxu0 0.0
        %782 = vmatprep.subr.mxu0 0.0
        %783 = vmatpush2.msra.mxu0 0.0
        %784 = vmatprep.subr.mxu0 0.0
        %785 = vmatpush2.msra.mxu0 0.0
        %786 = vmatprep.subr.mxu0 0.0
        %787 = vmatpush2.msra.mxu0 0.0
        %788 = vmatprep.subr.mxu0 0.0
        %789 = vmatpush2.msra.mxu0 0.0
        %790 = vmatprep.subr.mxu0 0.0
        %791 = vmatpush2.msra.mxu0 0.0
        %792 = vmatprep.subr.mxu0 0.0
        %793 = vmatpush2.msra.mxu0 0.0
        %794 = vmatprep.subr.mxu0 0.0
        %795 = vmatpush2.msra.mxu0 0.0
        %796 = vmatprep.subr.mxu0 0.0
        %797 = vmatpush2.msra.mxu0 0.0
        %798 = vmatprep.mubr.f32.mxu0 0.0
        %799 = vmatmul.mubr.f32.gmra.mxu0 %v652
        %v800 = vpop.f32.mrf.mxu0
        %v801 = vadd.f32 0.0, %v800
        %v802 = vpop.f32.mrf.mxu0
        %v803 = vadd.f32 0.0, %v802
        %804 = vmatprep.mubr.f32.mxu0 0.0
        %805 = vmatmul.mubr.f32.gmra.mxu0 %v655
        %v806 = vpop.f32.mrf.mxu0
        %v807 = vadd.f32 0.0, %v806
        %v808 = vpop.f32.mrf.mxu0
        %v809 = vadd.f32 0.0, %v808
        %810 = vdwg.mxu0
        %v811 = vadd.s32 %v298, 8
        %vm812 = vcmp.eq.s32.totalorder %v298, 12
        %vm813 = vcmp.eq.s32.totalorder %v811, 12
        %v814 = vcvt.s32.f32 %v290
        %v815 = vcvt.s32.f32 %v292
        %v816 = vcvt.s32.f32 %v294
        %v817 = vcvt.s32.f32 %v296
        %v818 = vsel %vm812, %v814, %v724
        %v819 = vsel %vm812, %v815, %v726
        %v820 = vsel %vm812, %v816, %v801
        %v821 = vsel %vm812, %v817, %v803
        %v822 = vsel %vm813, %v814, %v730
        %v823 = vsel %vm813, %v815, %v732
        %v824 = vsel %vm813, %v816, %v807
        %v825 = vsel %vm813, %v817, %v809
        %826 = vst [vmem:[%s213] sm:$0xff] %v818
        %827 = vst [vmem:[%s213 + $0x8] sm:$0xff] %v819
        %828 = vst [vmem:[%s213 + $0x10] sm:$0xff] %v820
        %829 = vst [vmem:[%s213 + $0x18] sm:$0xff] %v821
        %830 = vst [vmem:[%s213 + $0x20] sm:$0xff] %v822
        %831 = vst [vmem:[%s213 + $0x28] sm:$0xff] %v823
        %832 = vst [vmem:[%s213 + $0x30] sm:$0xff] %v824
        %833 = vst [vmem:[%s213 + $0x38] sm:$0xff] %v825
        %s834 = sand.u32 %s118, 1
        %s835 = scalar_lea.sflag [#allocation4], %s834
        %s836 = sand.u32 %s118, 1
        %s837 = smul.addr %s836, 64
        %s838 = scalar_lea.vmem [#allocation5], %s837
        // Predicated region
        $region41: #{tpu_custom_call.1} parent=35 // pred_check
          %p839 = pneg %p128
        $region42: #{tpu_custom_call.1} parent=35 // pred_check_branch
          %841 = sbr.rel (%p839) target = $region44
        $region43: #{tpu_custom_call.1} parent=35 // pred_region
          %s842 = smul.u32 4, %s21
          %s844 = ssub.s32 1024, 1024
          %845 = vsyncadd %s835, %s844
          %s846 = smul.addr %s842, 128
          %s847 = scalar_lea.hbm %s4, %s846
          %s848 = sshll.u32 %s838, 4
          %s849 = int_to_ptr.vmem [resolvable:$true] %s848
          %854 = dma.vmem_to_hbm [thread:$0]  %s849, 1024, %s847, %s835, 512, 1024, 32
        $region44: #{tpu_custom_call.1} parent=35 // pred_fallthru
          _
      $region36: #{tpu_custom_call.1} parent=5 // pred_fallthru
        _
      %p855 = scmp.le.s32.totalorder 2, %s16
      // Predicated region
      $region45: #{tpu_custom_call.1} parent=5 // pred_check
        %p856 = pneg %p855
      $region46: #{tpu_custom_call.1} parent=5 // pred_check_branch
        %858 = sbr.rel (%p856) target = $region48
      $region47: #{tpu_custom_call.1} parent=5 // pred_region
        %s859 = ssub.s32 %s16, 2
        // Predicated region
        $region49: #{tpu_custom_call.1} parent=47 // pred_check
          %p860 = pneg %p134
        $region50: #{tpu_custom_call.1} parent=47 // pred_check_branch
          %862 = sbr.rel (%p860) target = $region52
        $region51: #{tpu_custom_call.1} parent=47 // pred_region
          %s863 = sand.u32 %s119, 1
          %s864 = scalar_lea.sflag [#allocation4], %s863
          %s865 = sand.u32 %s119, 1
          %s866 = smul.addr %s865, 64
          %s867 = scalar_lea.vmem [#allocation5], %s866
          %868 = dma.done %s864, 1024
        $region52: #{tpu_custom_call.1} parent=47 // pred_fallthru
          _
      $region48: #{tpu_custom_call.1} parent=5 // pred_fallthru
        _
    $region6: #{tpu_custom_call.1} parent=1 // loop_footer
      %s20 = sadd.s32 1, %s16
    $region7: #{tpu_custom_call.1} parent=1 // loop_footer_branch
      %15 = sbr.rel target = $region3
    $region8: #{tpu_custom_call.1} parent=1 // loop_exit
      _
    %869 = vsyncpa [#allocation3], 1
    %s870 = scalar_lea.sflag [#allocation3], 1
    %871 = vsyncpa %s870, 1
    %872 = vsyncpa [#allocation4], 1
    %s873 = scalar_lea.sflag [#allocation4], 1
    %874 = vsyncpa %s873, 1

</llo_original>
